<compile_context>
chip_gen: v7x
topology: tpu7x:2x2x1
jax: 0.10.0
libtpu: 0.0.40
codegen_flags: <defaults>
</compile_context>

<pallas_src>
import jax
import jax.numpy as jnp
from jax.experimental import pallas as pl
from jax.experimental.pallas import tpu as pltpu

INPUT_SIZES = 8
HIDDEN_SIZE = 8
OUTPUT_SIZES = 2          # must be 2 for the residual add with x_short to be valid

PACK = 16                 # logical rows packed per 128-lane row (16 * 8 = 128 lanes)
TILE_R = 2048             # max packed rows per grid step (sweepable 1024-2048)


def _cdiv(a, b):
    return -(-a // b)


def _round_up(a, b):
    return _cdiv(a, b) * b


def _mlp_kernel(x_ref, w1_ref, b1_ref, w2_ref, b2_ref, w3_ref, b3_ref,
                w4s_ref, b4_ref, o_ref):
    # x: (tile_r, 128) f32 -- 16 logical 8-feature rows side-by-side per 128-lane row.
    x = x_ref[...]
    xb = x.astype(jnp.bfloat16)                       # bf16 operand for the MXU

    # fc1 -> relu   (block-diagonal bf16 weights, f32 accumulate, f32 bias)
    z = jnp.dot(xb, w1_ref[...], preferred_element_type=jnp.float32) + b1_ref[...]
    z = jnp.maximum(z, 0.0).astype(jnp.bfloat16)
    # fc2 -> relu
    z = jnp.dot(z, w2_ref[...], preferred_element_type=jnp.float32) + b2_ref[...]
    z = jnp.maximum(z, 0.0).astype(jnp.bfloat16)
    # fc3 -> relu
    z = jnp.dot(z, w3_ref[...], preferred_element_type=jnp.float32) + b3_ref[...]
    z = jnp.maximum(z, 0.0).astype(jnp.bfloat16)
    # fc4 + x_short residual fused into a single MXU op:
    #   lhs = [z3 | x] (tile_r, 256) bf16 , rhs = [w4_blockdiag ; sel_blockdiag] (256, 32)
    lhs = jnp.concatenate([z, xb], axis=1)
    out = jnp.dot(lhs, w4s_ref[...], preferred_element_type=jnp.float32) + b4_ref[...]

    o_ref[...] = out.astype(o_ref.dtype)


def _resident(shape):
    """Grid-invariant operand: same block every step, single-buffered in VMEM."""
    return pl.BlockSpec(shape, lambda i: (0, 0), pipeline_mode=pl.Buffered(1))


def pack_params(w1, b1, w2, b2, w3, b3, w4, b4):
    """Build the block-diagonal bf16 weights / tiled f32 biases ONCE per weight set
    (hoisted out of the per-call jitted path)."""
    eye = jnp.eye(PACK, dtype=jnp.float32)
    w1b = jnp.kron(eye, w1).astype(jnp.bfloat16)          # (128, 128)
    w2b = jnp.kron(eye, w2).astype(jnp.bfloat16)          # (128, 256)
    w3b = jnp.kron(eye, w3).astype(jnp.bfloat16)          # (256, 128)
    # x_short selector (exact 0/1 entries), fused under fc4: rhs = [w4b ; selb]
    sel = jnp.zeros((INPUT_SIZES, OUTPUT_SIZES), jnp.float32)
    sel = sel.at[INPUT_SIZES // 2 - 1, 0].set(1.0)
    sel = sel.at[INPUT_SIZES - 1, 1].set(1.0)
    w4s = jnp.concatenate([jnp.kron(eye, w4), jnp.kron(eye, sel)],
                          axis=0).astype(jnp.bfloat16)    # (256, 32)
    b1b = jnp.tile(b1, (1, PACK))                         # (1, 128) f32
    b2b = jnp.tile(b2, (1, PACK))                         # (1, 256) f32
    b3b = jnp.tile(b3, (1, PACK))                         # (1, 128) f32
    b4b = jnp.tile(b4, (1, PACK))                         # (1, 32)  f32
    return (w1b, b1b, w2b, b2b, w3b, b3b, w4s, b4b)


@jax.jit
def full_connect_mlp(x, packed):
    """x: any shape whose total size is divisible by INPUT_SIZES (like torch view)."""
    w1b, b1b, w2b, b2b, w3b, b3b, w4s, b4b = packed

    x2d = x.reshape(-1, INPUT_SIZES).astype(jnp.float32)
    n = x2d.shape[0]

    # ---- packed-row tiling (all static Python ints under jit) ----
    r = _cdiv(n, PACK)                              # packed 128-lane rows needed
    r_al = _round_up(max(r, 1), 8)
    num_tiles = _cdiv(r_al, TILE_R)
    if r_al >= 16:                                  # v7x: >=2 steps so both TCs get work
        num_tiles = max(num_tiles, 2)
    tile_r = _round_up(_cdiv(r_al, num_tiles), 8)   # balanced, 8-aligned
    num_tiles = _cdiv(r_al, tile_r)
    r_pad = tile_r * num_tiles
    n_pad = r_pad * PACK
    if n_pad != n:
        x2d = jnp.pad(x2d, ((0, n_pad - n), (0, 0)))

    # Free (metadata-only) repack: 16 logical rows per 128-lane row.
    xp = x2d.reshape(r_pad, PACK * INPUT_SIZES)

    flops = 2 * r_pad * (128 * 128 + 128 * 256 + 256 * 128 + 256 * 32)
    bytes_accessed = (xp.size * 4 + r_pad * PACK * OUTPUT_SIZES * 4
                      + sum(int(p.size) * p.dtype.itemsize for p in packed))

    out_p = pl.pallas_call(
        _mlp_kernel,
        out_shape=jax.ShapeDtypeStruct((r_pad, PACK * OUTPUT_SIZES), jnp.float32),
        grid=(num_tiles,),
        in_specs=[
            pl.BlockSpec((tile_r, PACK * INPUT_SIZES), lambda i: (i, 0)),  # x tile
            _resident(w1b.shape), _resident(b1b.shape),
            _resident(w2b.shape), _resident(b2b.shape),
            _resident(w3b.shape), _resident(b3b.shape),
            _resident(w4s.shape), _resident(b4b.shape),
        ],
        out_specs=pl.BlockSpec((tile_r, PACK * OUTPUT_SIZES), lambda i: (i, 0)),
        compiler_params=pltpu.CompilerParams(
            dimension_semantics=("parallel",),
            vmem_limit_bytes=32 * 1024 * 1024),
        cost_estimate=pl.CostEstimate(flops=flops, transcendentals=0,
                                      bytes_accessed=bytes_accessed),
    )(xp, w1b, b1b, w2b, b2b, w3b, b3b, w4s, b4b)

    # Free unpack back to (n, 2) logical layout.
    return out_p.reshape(n_pad, OUTPUT_SIZES)[:n]


def _init_params(key):
    """Deterministic parameter init. Weights stored as (in, out)."""
    dims = [
        (INPUT_SIZES, HIDDEN_SIZE),          # fc1
        (HIDDEN_SIZE, HIDDEN_SIZE * 2),      # fc2
        (HIDDEN_SIZE * 2, HIDDEN_SIZE),      # fc3
        (HIDDEN_SIZE, OUTPUT_SIZES),         # fc4
    ]
    params = []
    for fan_in, fan_out in dims:
        key, kw, kb = jax.random.split(key, 3)
        bound = 1.0 / (fan_in ** 0.5)
        w = jax.random.uniform(kw, (fan_in, fan_out), jnp.float32, -bound, bound)
        b = jax.random.uniform(kb, (1, fan_out), jnp.float32, -bound, bound)
        params += [w, b]
    return params


def _reference_f32(x, w1, b1, w2, b2, w3, b3, w4, b4):
    x2d = x.reshape(-1, INPUT_SIZES).astype(jnp.float32)
    x_short = x2d[:, jnp.array([INPUT_SIZES // 2 - 1, INPUT_SIZES - 1])]
    z1 = jnp.maximum(x2d @ w1 + b1, 0.0)
    z2 = jnp.maximum(z1 @ w2 + b2, 0.0)
    z3 = jnp.maximum(z2 @ w3 + b3, 0.0)
    return z3 @ w4 + b4 + x_short


def _reference_bf16(x, w1, b1, w2, b2, w3, b3, w4, b4):
    """Emulates the kernel numerics: bf16 matmul operands, f32 accumulate/bias,
    bf16 x in the residual."""
    f32, bf16 = jnp.float32, jnp.bfloat16
    x2d = x.reshape(-1, INPUT_SIZES).astype(f32)
    xb = x2d.astype(bf16)
    x_short = xb[:, jnp.array([INPUT_SIZES // 2 - 1, INPUT_SIZES - 1])].astype(f32)
    z = jnp.dot(xb, w1.astype(bf16), preferred_element_type=f32) + b1
    z = jnp.maximum(z, 0.0).astype(bf16)
    z = jnp.dot(z, w2.astype(bf16), preferred_element_type=f32) + b2
    z = jnp.maximum(z, 0.0).astype(bf16)
    z = jnp.dot(z, w3.astype(bf16), preferred_element_type=f32) + b3
    z = jnp.maximum(z, 0.0).astype(bf16)
    return jnp.dot(z, w4.astype(bf16), preferred_element_type=f32) + b4 + x_short


if __name__ == "__main__":
    key = jax.random.PRNGKey(0)
    key, k1, k2 = jax.random.split(key, 3)
    params = _init_params(key)
    packed = pack_params(*params)        # built once per weight set (hoisted)

    # small sanity shape (same as the original demo: view(-1, 8) -> 16 rows)
    x_small = jax.random.normal(k1, (4, 4, INPUT_SIZES), jnp.float32)
    # a larger (still small, ~1 MiB) batch exercising the multi-step "parallel" grid
    x_multi = jax.random.normal(k2, (2048, 16, INPUT_SIZES), jnp.float32)

    for xin in (x_small, x_multi):
        y = jax.block_until_ready(full_connect_mlp(xin, packed))
        n_rows = xin.size // INPUT_SIZES
        assert y.shape == (n_rows, OUTPUT_SIZES)

        # Tight structural check vs. a reference with identical bf16/f32 numerics.
        y_bf = _reference_bf16(xin, *params)
        assert jnp.allclose(y, y_bf, atol=1e-2, rtol=1e-2), \
            float(jnp.max(jnp.abs(y - y_bf)))

        # Loose check vs. the full-f32 reference (bf16 matmul quantization bound).
        y_f32 = _reference_f32(xin, *params)
        assert jnp.allclose(y, y_f32, atol=1e-1, rtol=2e-2), \
            float(jnp.max(jnp.abs(y - y_f32)))

    print("KERNEL_OK")
</pallas_src>

<mosaic_0001>
module attributes {stable_mosaic.version = 11 : i64} {
  func.func @_mlp_kernel(%arg0: i32, %arg1: memref<8x128xf32, #tpu.memory_space<vmem>>, %arg2: memref<128x128xbf16, #tpu.memory_space<vmem>>, %arg3: memref<1x128xf32, #tpu.memory_space<vmem>>, %arg4: memref<128x256xbf16, #tpu.memory_space<vmem>>, %arg5: memref<1x256xf32, #tpu.memory_space<vmem>>, %arg6: memref<256x128xbf16, #tpu.memory_space<vmem>>, %arg7: memref<1x128xf32, #tpu.memory_space<vmem>>, %arg8: memref<256x32xbf16, #tpu.memory_space<vmem>>, %arg9: memref<1x32xf32, #tpu.memory_space<vmem>>, %arg10: memref<8x32xf32, #tpu.memory_space<vmem>>) attributes {dimension_semantics = [#tpu.dimension_semantics<parallel>], iteration_bounds = array<i64: 1>, scalar_prefetch = 0 : i64, scratch_operands = 0 : i64, tpu.core_type = #tpu.core_type<tc>, window_params = [{transform_indices = @transform_0, window_bounds = array<i64: 8, 128>}, {pipeline_mode = #tpu.pipeline_mode<synchronous>, transform_indices = @transform_1, window_bounds = array<i64: 128, 128>}, {pipeline_mode = #tpu.pipeline_mode<synchronous>, transform_indices = @transform_2, window_bounds = array<i64: 1, 128>}, {pipeline_mode = #tpu.pipeline_mode<synchronous>, transform_indices = @transform_3, window_bounds = array<i64: 128, 256>}, {pipeline_mode = #tpu.pipeline_mode<synchronous>, transform_indices = @transform_4, window_bounds = array<i64: 1, 256>}, {pipeline_mode = #tpu.pipeline_mode<synchronous>, transform_indices = @transform_5, window_bounds = array<i64: 256, 128>}, {pipeline_mode = #tpu.pipeline_mode<synchronous>, transform_indices = @transform_6, window_bounds = array<i64: 1, 128>}, {pipeline_mode = #tpu.pipeline_mode<synchronous>, transform_indices = @transform_7, window_bounds = array<i64: 256, 32>}, {pipeline_mode = #tpu.pipeline_mode<synchronous>, transform_indices = @transform_8, window_bounds = array<i64: 1, 32>}, {transform_indices = @transform_9, window_bounds = array<i64: 8, 32>}]} {
    %c0 = arith.constant 0 : index
    %c0_0 = arith.constant 0 : index
    %0 = vector.load %arg1[%c0, %c0_0] : memref<8x128xf32, #tpu.memory_space<vmem>>, vector<8x128xf32>
    %1 = arith.truncf %0 : vector<8x128xf32> to vector<8x128xbf16>
    %c0_1 = arith.constant 0 : index
    %c0_2 = arith.constant 0 : index
    %2 = vector.load %arg2[%c0_1, %c0_2] : memref<128x128xbf16, #tpu.memory_space<vmem>>, vector<128x128xbf16>
    %cst = arith.constant dense<0.000000e+00> : vector<8x128xf32>
    %3 = tpu.matmul %1, %2, %cst {dimension_numbers = #tpu.dot_dimension_numbers<[1], [0], [0], [1], [0, 0, 1, 1], [], []>} : vector<8x128xbf16>, vector<128x128xbf16>, vector<8x128xf32> -> vector<8x128xf32>
    %c0_3 = arith.constant 0 : index
    %c0_4 = arith.constant 0 : index
    %4 = vector.load %arg3[%c0_3, %c0_4] : memref<1x128xf32, #tpu.memory_space<vmem>>, vector<1x128xf32>
    %5 = vector.broadcast %4 : vector<1x128xf32> to vector<8x128xf32>
    %6 = arith.addf %3, %5 : vector<8x128xf32>
    %cst_5 = arith.constant 0.000000e+00 : f32
    %7 = vector.broadcast %cst_5 : f32 to vector<8x128xf32>
    %8 = arith.maximumf %6, %7 : vector<8x128xf32>
    %9 = arith.truncf %8 : vector<8x128xf32> to vector<8x128xbf16>
    %c0_6 = arith.constant 0 : index
    %c0_7 = arith.constant 0 : index
    %10 = vector.load %arg4[%c0_6, %c0_7] : memref<128x256xbf16, #tpu.memory_space<vmem>>, vector<128x256xbf16>
    %cst_8 = arith.constant dense<0.000000e+00> : vector<8x256xf32>
    %11 = tpu.matmul %9, %10, %cst_8 {dimension_numbers = #tpu.dot_dimension_numbers<[1], [0], [0], [1], [0, 0, 1, 1], [], []>} : vector<8x128xbf16>, vector<128x256xbf16>, vector<8x256xf32> -> vector<8x256xf32>
    %c0_9 = arith.constant 0 : index
    %c0_10 = arith.constant 0 : index
    %12 = vector.load %arg5[%c0_9, %c0_10] : memref<1x256xf32, #tpu.memory_space<vmem>>, vector<1x256xf32>
    %13 = vector.broadcast %12 : vector<1x256xf32> to vector<8x256xf32>
    %14 = arith.addf %11, %13 : vector<8x256xf32>
    %cst_11 = arith.constant 0.000000e+00 : f32
    %15 = vector.broadcast %cst_11 : f32 to vector<8x256xf32>
    %16 = arith.maximumf %14, %15 : vector<8x256xf32>
    %17 = arith.truncf %16 : vector<8x256xf32> to vector<8x256xbf16>
    %c0_12 = arith.constant 0 : index
    %c0_13 = arith.constant 0 : index
    %18 = vector.load %arg6[%c0_12, %c0_13] : memref<256x128xbf16, #tpu.memory_space<vmem>>, vector<256x128xbf16>
    %cst_14 = arith.constant dense<0.000000e+00> : vector<8x128xf32>
    %19 = tpu.matmul %17, %18, %cst_14 {dimension_numbers = #tpu.dot_dimension_numbers<[1], [0], [0], [1], [0, 0, 1, 1], [], []>} : vector<8x256xbf16>, vector<256x128xbf16>, vector<8x128xf32> -> vector<8x128xf32>
    %c0_15 = arith.constant 0 : index
    %c0_16 = arith.constant 0 : index
    %20 = vector.load %arg7[%c0_15, %c0_16] : memref<1x128xf32, #tpu.memory_space<vmem>>, vector<1x128xf32>
    %21 = vector.broadcast %20 : vector<1x128xf32> to vector<8x128xf32>
    %22 = arith.addf %19, %21 : vector<8x128xf32>
    %cst_17 = arith.constant 0.000000e+00 : f32
    %23 = vector.broadcast %cst_17 : f32 to vector<8x128xf32>
    %24 = arith.maximumf %22, %23 : vector<8x128xf32>
    %25 = arith.truncf %24 : vector<8x128xf32> to vector<8x128xbf16>
    %26 = tpu.concatenate %25, %1 in 1 : vector<8x128xbf16>, vector<8x128xbf16> -> vector<8x256xbf16>
    %c0_18 = arith.constant 0 : index
    %c0_19 = arith.constant 0 : index
    %27 = vector.load %arg8[%c0_18, %c0_19] : memref<256x32xbf16, #tpu.memory_space<vmem>>, vector<256x32xbf16>
    %cst_20 = arith.constant dense<0.000000e+00> : vector<8x32xf32>
    %28 = tpu.matmul %26, %27, %cst_20 {dimension_numbers = #tpu.dot_dimension_numbers<[1], [0], [0], [1], [0, 0, 1, 1], [], []>} : vector<8x256xbf16>, vector<256x32xbf16>, vector<8x32xf32> -> vector<8x32xf32>
    %c0_21 = arith.constant 0 : index
    %c0_22 = arith.constant 0 : index
    %29 = vector.load %arg9[%c0_21, %c0_22] : memref<1x32xf32, #tpu.memory_space<vmem>>, vector<1x32xf32>
    %30 = vector.broadcast %29 : vector<1x32xf32> to vector<8x32xf32>
    %31 = arith.addf %28, %30 : vector<8x32xf32>
    %c0_23 = arith.constant 0 : index
    %c0_24 = arith.constant 0 : index
    %32 = vector.load %arg10[%c0_23, %c0_24] : memref<8x32xf32, #tpu.memory_space<vmem>>, vector<8x32xf32>
    tpu.vector_store %arg10[%c0_23, %c0_24], %31 {strides = array<i32>} : memref<8x32xf32, #tpu.memory_space<vmem>>, vector<8x32xf32>,
    return
  }
  func.func @transform_0(%arg0: i32) -> (i32, i32) {
    %c0_i32 = arith.constant 0 : i32
    %c0_i32_0 = arith.constant 0 : i32
    return %arg0, %c0_i32 : i32, i32
  }
  func.func @transform_1(%arg0: i32) -> (i32, i32) {
    %c0_i32 = arith.constant 0 : i32
    %c0_i32_0 = arith.constant 0 : i32
    %c0_i32_1 = arith.constant 0 : i32
    return %c0_i32, %c0_i32_0 : i32, i32
  }
  func.func @transform_2(%arg0: i32) -> (i32, i32) {
    %c0_i32 = arith.constant 0 : i32
    %c0_i32_0 = arith.constant 0 : i32
    %c0_i32_1 = arith.constant 0 : i32
    return %c0_i32, %c0_i32_0 : i32, i32
  }
  func.func @transform_3(%arg0: i32) -> (i32, i32) {
    %c0_i32 = arith.constant 0 : i32
    %c0_i32_0 = arith.constant 0 : i32
    %c0_i32_1 = arith.constant 0 : i32
    return %c0_i32, %c0_i32_0 : i32, i32
  }
  func.func @transform_4(%arg0: i32) -> (i32, i32) {
    %c0_i32 = arith.constant 0 : i32
    %c0_i32_0 = arith.constant 0 : i32
    %c0_i32_1 = arith.constant 0 : i32
    return %c0_i32, %c0_i32_0 : i32, i32
  }
  func.func @transform_5(%arg0: i32) -> (i32, i32) {
    %c0_i32 = arith.constant 0 : i32
    %c0_i32_0 = arith.constant 0 : i32
    %c0_i32_1 = arith.constant 0 : i32
    return %c0_i32, %c0_i32_0 : i32, i32
  }
  func.func @transform_6(%arg0: i32) -> (i32, i32) {
    %c0_i32 = arith.constant 0 : i32
    %c0_i32_0 = arith.constant 0 : i32
    %c0_i32_1 = arith.constant 0 : i32
    return %c0_i32, %c0_i32_0 : i32, i32
  }
  func.func @transform_7(%arg0: i32) -> (i32, i32) {
    %c0_i32 = arith.constant 0 : i32
    %c0_i32_0 = arith.constant 0 : i32
    %c0_i32_1 = arith.constant 0 : i32
    return %c0_i32, %c0_i32_0 : i32, i32
  }
  func.func @transform_8(%arg0: i32) -> (i32, i32) {
    %c0_i32 = arith.constant 0 : i32
    %c0_i32_0 = arith.constant 0 : i32
    %c0_i32_1 = arith.constant 0 : i32
    return %c0_i32, %c0_i32_0 : i32, i32
  }
  func.func @transform_9(%arg0: i32) -> (i32, i32) {
    %c0_i32 = arith.constant 0 : i32
    %c0_i32_0 = arith.constant 0 : i32
    return %arg0, %c0_i32 : i32, i32
  }
}

</mosaic_0001>

<llo_original>
// kernel: full_connect_mlp.1
$region0: #{full_connect_mlp.1}
  #allocation0 [shape = 'u32[]', space=smem, size = 0x4, offset = 0x4, fixed_abs, tag = 'smem constant byte address 0x4 - core index']
  #allocation1 [shape = 'u32[144,128]{1,0:T(1,128)}', space=vmem, size = 0x12000, scoped, tag = 'internal scratch']
  %s0 = inlined_call_operand.vmem [shape: f32[8,128], index: 0, kind: input, shape index: {}]
  %s1 = inlined_call_operand.vmem [shape: bf16[128,128], index: 1, kind: input, shape index: {}]
  %s2 = inlined_call_operand.vmem [shape: f32[1,128], index: 2, kind: input, shape index: {}]
  %s3 = inlined_call_operand.vmem [shape: bf16[128,256], index: 3, kind: input, shape index: {}]
  %s4 = inlined_call_operand.vmem [shape: f32[1,256], index: 4, kind: input, shape index: {}]
  %s5 = inlined_call_operand.vmem [shape: bf16[256,128], index: 5, kind: input, shape index: {}]
  %s6 = inlined_call_operand.vmem [shape: f32[1,128], index: 6, kind: input, shape index: {}]
  %s7 = inlined_call_operand.vmem [shape: bf16[256,32], index: 7, kind: input, shape index: {}]
  %s8 = inlined_call_operand.vmem [shape: f32[1,32], index: 8, kind: input, shape index: {}]
  %s9 = inlined_call_operand.vmem [shape: f32[8,32], index: 9, kind: output, shape index: {}]
  %s10 = sld [smem:[#allocation0]]
  $region46: #{full_connect_mlp.1} parent=0
    _
  %s12 = ssub.s32 1, %s10
  %s13 = scalar_select 0, %s12, %s10
  // Predicated region
  $region2: #{full_connect_mlp.1} parent=0 // pred_check
    _
  $region3: #{full_connect_mlp.1} parent=0 // pred_check_branch
    %15 = sbr.rel (0) target = $region5
  $region4: #{full_connect_mlp.1} parent=0 // pred_region
    _
  $region5: #{full_connect_mlp.1} parent=0 // pred_fallthru
    _
  // Predicated region
  $region6: #{full_connect_mlp.1} parent=0 // pred_check
    _
  $region7: #{full_connect_mlp.1} parent=0 // pred_check_branch
    %17 = sbr.rel (0) target = $region9
  $region8: #{full_connect_mlp.1} parent=0 // pred_region
    _
  $region9: #{full_connect_mlp.1} parent=0 // pred_fallthru
    _
  // Predicated region
  $region10: #{full_connect_mlp.1} parent=0 // pred_check
    _
  $region11: #{full_connect_mlp.1} parent=0 // pred_check_branch
    %19 = sbr.rel (0) target = $region13
  $region12: #{full_connect_mlp.1} parent=0 // pred_region
    _
  $region13: #{full_connect_mlp.1} parent=0 // pred_fallthru
    _
  // Predicated region
  $region14: #{full_connect_mlp.1} parent=0 // pred_check
    _
  $region15: #{full_connect_mlp.1} parent=0 // pred_check_branch
    %21 = sbr.rel (0) target = $region17
  $region16: #{full_connect_mlp.1} parent=0 // pred_region
    _
  $region17: #{full_connect_mlp.1} parent=0 // pred_fallthru
    _
  // Predicated region
  $region18: #{full_connect_mlp.1} parent=0 // pred_check
    _
  $region19: #{full_connect_mlp.1} parent=0 // pred_check_branch
    %23 = sbr.rel (0) target = $region21
  $region20: #{full_connect_mlp.1} parent=0 // pred_region
    _
  $region21: #{full_connect_mlp.1} parent=0 // pred_fallthru
    _
  // Predicated region
  $region22: #{full_connect_mlp.1} parent=0 // pred_check
    _
  $region23: #{full_connect_mlp.1} parent=0 // pred_check_branch
    %25 = sbr.rel (0) target = $region25
  $region24: #{full_connect_mlp.1} parent=0 // pred_region
    _
  $region25: #{full_connect_mlp.1} parent=0 // pred_fallthru
    _
  // Predicated region
  $region26: #{full_connect_mlp.1} parent=0 // pred_check
    _
  $region27: #{full_connect_mlp.1} parent=0 // pred_check_branch
    %27 = sbr.rel (0) target = $region29
  $region28: #{full_connect_mlp.1} parent=0 // pred_region
    _
  $region29: #{full_connect_mlp.1} parent=0 // pred_fallthru
    _
  // Predicated region
  $region30: #{full_connect_mlp.1} parent=0 // pred_check
    _
  $region31: #{full_connect_mlp.1} parent=0 // pred_check_branch
    %29 = sbr.rel (0) target = $region33
  $region32: #{full_connect_mlp.1} parent=0 // pred_region
    _
  $region33: #{full_connect_mlp.1} parent=0 // pred_fallthru
    _
  // Predicated region
  $region34: #{full_connect_mlp.1} parent=0 // pred_check
    _
  $region35: #{full_connect_mlp.1} parent=0 // pred_check_branch
    %31 = sbr.rel (0) target = $region37
  $region36: #{full_connect_mlp.1} parent=0 // pred_region
    _
  $region37: #{full_connect_mlp.1} parent=0 // pred_fallthru
    _
  %v33 = vld [vmem:[%s0] sm:$0xff]
  %v34 = vpack.c.bf16 %v33, %v33
  %v35 = vld [vmem:[%s1] sm:$0xf]
  %v36 = vld [vmem:[%s1 + $0x4] sm:$0xf]
  %v37 = vld [vmem:[%s1 + $0x8] sm:$0xf]
  %v38 = vld [vmem:[%s1 + $0xc] sm:$0xf]
  %v39 = vld [vmem:[%s1 + $0x10] sm:$0xf]
  %v40 = vld [vmem:[%s1 + $0x14] sm:$0xf]
  %v41 = vld [vmem:[%s1 + $0x18] sm:$0xf]
  %v42 = vld [vmem:[%s1 + $0x1c] sm:$0xf]
  %v43 = vld [vmem:[%s1 + $0x20] sm:$0xf]
  %v44 = vld [vmem:[%s1 + $0x24] sm:$0xf]
  %v45 = vld [vmem:[%s1 + $0x28] sm:$0xf]
  %v46 = vld [vmem:[%s1 + $0x2c] sm:$0xf]
  %v47 = vld [vmem:[%s1 + $0x30] sm:$0xf]
  %v48 = vld [vmem:[%s1 + $0x34] sm:$0xf]
  %v49 = vld [vmem:[%s1 + $0x38] sm:$0xf]
  %v50 = vld [vmem:[%s1 + $0x3c] sm:$0xf]
  %v51 = vld [vmem:[%s2] sm:$0x1]
  %v53 = vlaneseq
  %v54 = vshrl.u32 %v53, 7
  %v55 = vsub.s32 0, %v54
  %v56 = vrot.slane %v51, %v55
  %v74 = vunpack.c.l.b16 %v35
  %v75 = vunpack.c.l.b16 %v36
  %v76 = vunpack.c.l.b16 %v37
  %v77 = vunpack.c.l.b16 %v38
  %v78 = vunpack.c.l.b16 %v39
  %v79 = vunpack.c.l.b16 %v40
  %v80 = vunpack.c.l.b16 %v41
  %v81 = vunpack.c.l.b16 %v42
  %v82 = vunpack.c.l.b16 %v43
  %v83 = vunpack.c.l.b16 %v44
  %v84 = vunpack.c.l.b16 %v45
  %v85 = vunpack.c.l.b16 %v46
  %v86 = vunpack.c.l.b16 %v47
  %v87 = vunpack.c.l.b16 %v48
  %v88 = vunpack.c.l.b16 %v49
  %v89 = vunpack.c.l.b16 %v50
  %v90 = vpack.c.b16 %v75, %v74
  %v91 = vpack.c.b16 %v77, %v76
  %v92 = vpack.c.b16 %v79, %v78
  %v93 = vpack.c.b16 %v81, %v80
  %v94 = vpack.c.b16 %v83, %v82
  %v95 = vpack.c.b16 %v85, %v84
  %v96 = vpack.c.b16 %v87, %v86
  %v97 = vpack.c.b16 %v89, %v88
  %106 = vmatprep.subr.bf16.mxu0 0
  %107 = vmatpush1.bf16.msra.mxu0 %v90
  %108 = vmatprep.subr.bf16.mxu0 0
  %109 = vmatpush1.bf16.msra.mxu0 %v91
  %110 = vmatprep.subr.bf16.mxu0 0
  %111 = vmatpush1.bf16.msra.mxu0 %v92
  %112 = vmatprep.subr.bf16.mxu0 0
  %113 = vmatpush1.bf16.msra.mxu0 %v93
  %114 = vmatprep.subr.bf16.mxu0 0
  %115 = vmatpush1.bf16.msra.mxu0 %v94
  %116 = vmatprep.subr.bf16.mxu0 0
  %117 = vmatpush1.bf16.msra.mxu0 %v95
  %118 = vmatprep.subr.bf16.mxu0 0
  %119 = vmatpush1.bf16.msra.mxu0 %v96
  %120 = vmatprep.subr.bf16.mxu0 0
  %121 = vmatpush1.bf16.msra.mxu0 %v97
  %122 = vmatprep.subr.bf16.mxu0 0
  %123 = vmatpush1.bf16.msra.mxu0 0
  %124 = vmatprep.subr.bf16.mxu0 0
  %125 = vmatpush1.bf16.msra.mxu0 0
  %126 = vmatprep.subr.bf16.mxu0 0
  %127 = vmatpush1.bf16.msra.mxu0 0
  %128 = vmatprep.subr.bf16.mxu0 0
  %129 = vmatpush1.bf16.msra.mxu0 0
  %130 = vmatprep.subr.bf16.mxu0 0
  %131 = vmatpush1.bf16.msra.mxu0 0
  %132 = vmatprep.subr.bf16.mxu0 0
  %133 = vmatpush1.bf16.msra.mxu0 0
  %134 = vmatprep.subr.bf16.mxu0 0
  %135 = vmatpush1.bf16.msra.mxu0 0
  %136 = vmatprep.subr.bf16.mxu0 0
  %137 = vmatpush1.bf16.msra.mxu0 0
  %138 = vmatprep.mubr.bf16.mxu0 0
  %139 = vmatmul.mubr.bf16.gmra.mrb[0].mxu0 %v34
  %v140 = vpop.f32.mrb[0].mxu0
  %v141 = vadd.f32 %v56, %v140
  %v142 = vpop.f32.mrb[0].mxu0
  %v143 = vpop.f32.mrb[0].mxu0
  %v144 = vpop.f32.mrb[0].mxu0
  %145 = vdwg.mxu0
  %v146 = vmax.f32 %v141, 0.0
  %v147 = vpack.c.bf16 %v146, %v146
  %v148 = vld [vmem:[%s3] sm:$0xff]
  %v149 = vld [vmem:[%s3 + $0x8] sm:$0xff]
  %v150 = vld [vmem:[%s3 + $0x10] sm:$0xff]
  %v151 = vld [vmem:[%s3 + $0x18] sm:$0xff]
  %v152 = vld [vmem:[%s3 + $0x20] sm:$0xff]
  %v153 = vld [vmem:[%s3 + $0x28] sm:$0xff]
  %v154 = vld [vmem:[%s3 + $0x30] sm:$0xff]
  %v155 = vld [vmem:[%s3 + $0x38] sm:$0xff]
  %v156 = vld [vmem:[%s3 + $0x40] sm:$0xff]
  %v157 = vld [vmem:[%s3 + $0x48] sm:$0xff]
  %v158 = vld [vmem:[%s3 + $0x50] sm:$0xff]
  %v159 = vld [vmem:[%s3 + $0x58] sm:$0xff]
  %v160 = vld [vmem:[%s3 + $0x60] sm:$0xff]
  %v161 = vld [vmem:[%s3 + $0x68] sm:$0xff]
  %v162 = vld [vmem:[%s3 + $0x70] sm:$0xff]
  %v163 = vld [vmem:[%s3 + $0x78] sm:$0xff]
  %v164 = vld [vmem:[%s4] sm:$0x3]
  %v166 = vlaneseq
  %v167 = vshrl.u32 %v166, 7
  %v168 = vsub.s32 0, %v167
  %v169 = vrot.slane %v164, %v168
  %v170 = vlaneseq
  %v171 = vshrl.u32 %v170, 7
  %v172 = vsub.s32 1, %v171
  %v173 = vrot.slane %v164, %v172
  %v192 = vunpack.c.l.b16 %v148
  %v193 = vunpack.c.h.b16 %v148
  %v194 = vunpack.c.l.b16 %v149
  %v195 = vunpack.c.h.b16 %v149
  %v196 = vunpack.c.l.b16 %v150
  %v197 = vunpack.c.h.b16 %v150
  %v198 = vunpack.c.l.b16 %v151
  %v199 = vunpack.c.h.b16 %v151
  %v200 = vunpack.c.l.b16 %v152
  %v201 = vunpack.c.h.b16 %v152
  %v202 = vunpack.c.l.b16 %v153
  %v203 = vunpack.c.h.b16 %v153
  %v204 = vunpack.c.l.b16 %v154
  %v205 = vunpack.c.h.b16 %v154
  %v206 = vunpack.c.l.b16 %v155
  %v207 = vunpack.c.h.b16 %v155
  %v208 = vunpack.c.l.b16 %v156
  %v209 = vunpack.c.h.b16 %v156
  %v210 = vunpack.c.l.b16 %v157
  %v211 = vunpack.c.h.b16 %v157
  %v212 = vunpack.c.l.b16 %v158
  %v213 = vunpack.c.h.b16 %v158
  %v214 = vunpack.c.l.b16 %v159
  %v215 = vunpack.c.h.b16 %v159
  %v216 = vunpack.c.l.b16 %v160
  %v217 = vunpack.c.h.b16 %v160
  %v218 = vunpack.c.l.b16 %v161
  %v219 = vunpack.c.h.b16 %v161
  %v220 = vunpack.c.l.b16 %v162
  %v221 = vunpack.c.h.b16 %v162
  %v222 = vunpack.c.l.b16 %v163
  %v223 = vunpack.c.h.b16 %v163
  %v224 = vpack.c.b16 %v194, %v192
  %v225 = vpack.c.b16 %v195, %v193
  %v226 = vpack.c.b16 %v198, %v196
  %v227 = vpack.c.b16 %v199, %v197
  %v228 = vpack.c.b16 %v202, %v200
  %v229 = vpack.c.b16 %v203, %v201
  %v230 = vpack.c.b16 %v206, %v204
  %v231 = vpack.c.b16 %v207, %v205
  %v232 = vpack.c.b16 %v210, %v208
  %v233 = vpack.c.b16 %v211, %v209
  %v234 = vpack.c.b16 %v214, %v212
  %v235 = vpack.c.b16 %v215, %v213
  %v236 = vpack.c.b16 %v218, %v216
  %v237 = vpack.c.b16 %v219, %v217
  %v238 = vpack.c.b16 %v222, %v220
  %v239 = vpack.c.b16 %v223, %v221
  %256 = vmatprep.subr.bf16.mxu0 %v225
  %257 = vmatpush1.bf16.msra.mxu0 %v224
  %258 = vmatprep.subr.bf16.mxu0 %v227
  %259 = vmatpush1.bf16.msra.mxu0 %v226
  %260 = vmatprep.subr.bf16.mxu0 %v229
  %261 = vmatpush1.bf16.msra.mxu0 %v228
  %262 = vmatprep.subr.bf16.mxu0 %v231
  %263 = vmatpush1.bf16.msra.mxu0 %v230
  %264 = vmatprep.subr.bf16.mxu0 %v233
  %265 = vmatpush1.bf16.msra.mxu0 %v232
  %266 = vmatprep.subr.bf16.mxu0 %v235
  %267 = vmatpush1.bf16.msra.mxu0 %v234
  %268 = vmatprep.subr.bf16.mxu0 %v237
  %269 = vmatpush1.bf16.msra.mxu0 %v236
  %270 = vmatprep.subr.bf16.mxu0 %v239
  %271 = vmatpush1.bf16.msra.mxu0 %v238
  %272 = vmatprep.subr.bf16.mxu0 0
  %273 = vmatpush1.bf16.msra.mxu0 0
  %274 = vmatprep.subr.bf16.mxu0 0
  %275 = vmatpush1.bf16.msra.mxu0 0
  %276 = vmatprep.subr.bf16.mxu0 0
  %277 = vmatpush1.bf16.msra.mxu0 0
  %278 = vmatprep.subr.bf16.mxu0 0
  %279 = vmatpush1.bf16.msra.mxu0 0
  %280 = vmatprep.subr.bf16.mxu0 0
  %281 = vmatpush1.bf16.msra.mxu0 0
  %282 = vmatprep.subr.bf16.mxu0 0
  %283 = vmatpush1.bf16.msra.mxu0 0
  %284 = vmatprep.subr.bf16.mxu0 0
  %285 = vmatpush1.bf16.msra.mxu0 0
  %286 = vmatprep.subr.bf16.mxu0 0
  %287 = vmatpush1.bf16.msra.mxu0 0
  %288 = vmatprep.mubr.bf16.mxu0 0
  %289 = vmatmul.mubr.bf16.gmra.mrb[0].mxu0 %v147
  %v290 = vpop.f32.mrb[0].mxu0
  %v291 = vadd.f32 %v169, %v290
  %v292 = vpop.f32.mrb[0].mxu0
  %v293 = vadd.f32 %v173, %v292
  %v294 = vpop.f32.mrb[0].mxu0
  %v295 = vpop.f32.mrb[0].mxu0
  %296 = vdwg.mxu0
  %v297 = vmax.f32 %v291, 0.0
  %v298 = vmax.f32 %v293, 0.0
  %v299 = vpack.c.bf16 %v297, %v297
  %v300 = vpack.c.bf16 %v298, %v298
  %v301 = vld [vmem:[%s5] sm:$0xf]
  %v302 = vld [vmem:[%s5 + $0x4] sm:$0xf]
  %v303 = vld [vmem:[%s5 + $0x8] sm:$0xf]
  %v304 = vld [vmem:[%s5 + $0xc] sm:$0xf]
  %v305 = vld [vmem:[%s5 + $0x10] sm:$0xf]
  %v306 = vld [vmem:[%s5 + $0x14] sm:$0xf]
  %v307 = vld [vmem:[%s5 + $0x18] sm:$0xf]
  %v308 = vld [vmem:[%s5 + $0x1c] sm:$0xf]
  %v309 = vld [vmem:[%s5 + $0x20] sm:$0xf]
  %v310 = vld [vmem:[%s5 + $0x24] sm:$0xf]
  %v311 = vld [vmem:[%s5 + $0x28] sm:$0xf]
  %v312 = vld [vmem:[%s5 + $0x2c] sm:$0xf]
  %v313 = vld [vmem:[%s5 + $0x30] sm:$0xf]
  %v314 = vld [vmem:[%s5 + $0x34] sm:$0xf]
  %v315 = vld [vmem:[%s5 + $0x38] sm:$0xf]
  %v316 = vld [vmem:[%s5 + $0x3c] sm:$0xf]
  %v317 = vld [vmem:[%s5 + $0x40] sm:$0xf]
  %v318 = vld [vmem:[%s5 + $0x44] sm:$0xf]
  %v319 = vld [vmem:[%s5 + $0x48] sm:$0xf]
  %v320 = vld [vmem:[%s5 + $0x4c] sm:$0xf]
  %v321 = vld [vmem:[%s5 + $0x50] sm:$0xf]
  %v322 = vld [vmem:[%s5 + $0x54] sm:$0xf]
  %v323 = vld [vmem:[%s5 + $0x58] sm:$0xf]
  %v324 = vld [vmem:[%s5 + $0x5c] sm:$0xf]
  %v325 = vld [vmem:[%s5 + $0x60] sm:$0xf]
  %v326 = vld [vmem:[%s5 + $0x64] sm:$0xf]
  %v327 = vld [vmem:[%s5 + $0x68] sm:$0xf]
  %v328 = vld [vmem:[%s5 + $0x6c] sm:$0xf]
  %v329 = vld [vmem:[%s5 + $0x70] sm:$0xf]
  %v330 = vld [vmem:[%s5 + $0x74] sm:$0xf]
  %v331 = vld [vmem:[%s5 + $0x78] sm:$0xf]
  %v332 = vld [vmem:[%s5 + $0x7c] sm:$0xf]
  %v333 = vld [vmem:[%s6] sm:$0x1]
  %v335 = vlaneseq
  %v336 = vshrl.u32 %v335, 7
  %v337 = vsub.s32 0, %v336
  %v338 = vrot.slane %v333, %v337
  %v372 = vunpack.c.l.b16 %v301
  %v373 = vunpack.c.l.b16 %v302
  %v374 = vunpack.c.l.b16 %v303
  %v375 = vunpack.c.l.b16 %v304
  %v376 = vunpack.c.l.b16 %v305
  %v377 = vunpack.c.l.b16 %v306
  %v378 = vunpack.c.l.b16 %v307
  %v379 = vunpack.c.l.b16 %v308
  %v380 = vunpack.c.l.b16 %v309
  %v381 = vunpack.c.l.b16 %v310
  %v382 = vunpack.c.l.b16 %v311
  %v383 = vunpack.c.l.b16 %v312
  %v384 = vunpack.c.l.b16 %v313
  %v385 = vunpack.c.l.b16 %v314
  %v386 = vunpack.c.l.b16 %v315
  %v387 = vunpack.c.l.b16 %v316
  %v388 = vunpack.c.l.b16 %v317
  %v389 = vunpack.c.l.b16 %v318
  %v390 = vunpack.c.l.b16 %v319
  %v391 = vunpack.c.l.b16 %v320
  %v392 = vunpack.c.l.b16 %v321
  %v393 = vunpack.c.l.b16 %v322
  %v394 = vunpack.c.l.b16 %v323
  %v395 = vunpack.c.l.b16 %v324
  %v396 = vunpack.c.l.b16 %v325
  %v397 = vunpack.c.l.b16 %v326
  %v398 = vunpack.c.l.b16 %v327
  %v399 = vunpack.c.l.b16 %v328
  %v400 = vunpack.c.l.b16 %v329
  %v401 = vunpack.c.l.b16 %v330
  %v402 = vunpack.c.l.b16 %v331
  %v403 = vunpack.c.l.b16 %v332
  %v404 = vpack.c.b16 %v373, %v372
  %v405 = vpack.c.b16 %v375, %v374
  %v406 = vpack.c.b16 %v377, %v376
  %v407 = vpack.c.b16 %v379, %v378
  %v408 = vpack.c.b16 %v381, %v380
  %v409 = vpack.c.b16 %v383, %v382
  %v410 = vpack.c.b16 %v385, %v384
  %v411 = vpack.c.b16 %v387, %v386
  %v412 = vpack.c.b16 %v389, %v388
  %v413 = vpack.c.b16 %v391, %v390
  %v414 = vpack.c.b16 %v393, %v392
  %v415 = vpack.c.b16 %v395, %v394
  %v416 = vpack.c.b16 %v397, %v396
  %v417 = vpack.c.b16 %v399, %v398
  %v418 = vpack.c.b16 %v401, %v400
  %v419 = vpack.c.b16 %v403, %v402
  %436 = vmatprep.subr.bf16.mxu0 0
  %437 = vmatpush1.bf16.msra.mxu0 %v404
  %438 = vmatprep.subr.bf16.mxu0 0
  %439 = vmatpush1.bf16.msra.mxu0 %v405
  %440 = vmatprep.subr.bf16.mxu0 0
  %441 = vmatpush1.bf16.msra.mxu0 %v406
  %442 = vmatprep.subr.bf16.mxu0 0
  %443 = vmatpush1.bf16.msra.mxu0 %v407
  %444 = vmatprep.subr.bf16.mxu0 0
  %445 = vmatpush1.bf16.msra.mxu0 %v408
  %446 = vmatprep.subr.bf16.mxu0 0
  %447 = vmatpush1.bf16.msra.mxu0 %v409
  %448 = vmatprep.subr.bf16.mxu0 0
  %449 = vmatpush1.bf16.msra.mxu0 %v410
  %450 = vmatprep.subr.bf16.mxu0 0
  %451 = vmatpush1.bf16.msra.mxu0 %v411
  %452 = vmatprep.subr.bf16.mxu0 0
  %453 = vmatpush1.bf16.msra.mxu0 %v412
  %454 = vmatprep.subr.bf16.mxu0 0
  %455 = vmatpush1.bf16.msra.mxu0 %v413
  %456 = vmatprep.subr.bf16.mxu0 0
  %457 = vmatpush1.bf16.msra.mxu0 %v414
  %458 = vmatprep.subr.bf16.mxu0 0
  %459 = vmatpush1.bf16.msra.mxu0 %v415
  %460 = vmatprep.subr.bf16.mxu0 0
  %461 = vmatpush1.bf16.msra.mxu0 %v416
  %462 = vmatprep.subr.bf16.mxu0 0
  %463 = vmatpush1.bf16.msra.mxu0 %v417
  %464 = vmatprep.subr.bf16.mxu0 0
  %465 = vmatpush1.bf16.msra.mxu0 %v418
  %466 = vmatprep.subr.bf16.mxu0 0
  %467 = vmatpush1.bf16.msra.mxu0 %v419
  %468 = vmatprep.mubr.bf16.mxu0 %v300
  %469 = vmatmul.mubr.bf16.gmra.mrb[0].mxu0 %v299
  %v470 = vpop.f32.mrb[0].mxu0
  %v471 = vadd.f32 %v338, %v470
  %v472 = vpop.f32.mrb[0].mxu0
  %v473 = vpop.f32.mrb[0].mxu0
  %v474 = vpop.f32.mrb[0].mxu0
  %475 = vdwg.mxu0
  %v476 = vmax.f32 %v471, 0.0
  %v477 = vpack.c.bf16 %v476, %v476
  %v478 = vld [vmem:[%s7] sm:$0xf]
  %v479 = vld [vmem:[%s7 + $0x4] sm:$0xf]
  %v480 = vld [vmem:[%s7 + $0x8] sm:$0xf]
  %v481 = vld [vmem:[%s7 + $0xc] sm:$0xf]
  %v482 = vld [vmem:[%s7 + $0x10] sm:$0xf]
  %v483 = vld [vmem:[%s7 + $0x14] sm:$0xf]
  %v484 = vld [vmem:[%s7 + $0x18] sm:$0xf]
  %v485 = vld [vmem:[%s7 + $0x1c] sm:$0xf]
  %v486 = vld [vmem:[%s7 + $0x20] sm:$0xf]
  %v487 = vld [vmem:[%s7 + $0x24] sm:$0xf]
  %v488 = vld [vmem:[%s7 + $0x28] sm:$0xf]
  %v489 = vld [vmem:[%s7 + $0x2c] sm:$0xf]
  %v490 = vld [vmem:[%s7 + $0x30] sm:$0xf]
  %v491 = vld [vmem:[%s7 + $0x34] sm:$0xf]
  %v492 = vld [vmem:[%s7 + $0x38] sm:$0xf]
  %v493 = vld [vmem:[%s7 + $0x3c] sm:$0xf]
  %v494 = vld [vmem:[%s7 + $0x40] sm:$0xf]
  %v495 = vld [vmem:[%s7 + $0x44] sm:$0xf]
  %v496 = vld [vmem:[%s7 + $0x48] sm:$0xf]
  %v497 = vld [vmem:[%s7 + $0x4c] sm:$0xf]
  %v498 = vld [vmem:[%s7 + $0x50] sm:$0xf]
  %v499 = vld [vmem:[%s7 + $0x54] sm:$0xf]
  %v500 = vld [vmem:[%s7 + $0x58] sm:$0xf]
  %v501 = vld [vmem:[%s7 + $0x5c] sm:$0xf]
  %v502 = vld [vmem:[%s7 + $0x60] sm:$0xf]
  %v503 = vld [vmem:[%s7 + $0x64] sm:$0xf]
  %v504 = vld [vmem:[%s7 + $0x68] sm:$0xf]
  %v505 = vld [vmem:[%s7 + $0x6c] sm:$0xf]
  %v506 = vld [vmem:[%s7 + $0x70] sm:$0xf]
  %v507 = vld [vmem:[%s7 + $0x74] sm:$0xf]
  %v508 = vld [vmem:[%s7 + $0x78] sm:$0xf]
  %v509 = vld [vmem:[%s7 + $0x7c] sm:$0xf]
  %v510 = vld [vmem:[%s8] sm:$0x1]
  %v512 = vlaneseq
  %v513 = vshrl.u32 %v512, 7
  %v514 = vsub.s32 0, %v513
  %v515 = vrot.slane %v510, %v514
  %v549 = vunpack.c.l.b16 %v478
  %v550 = vunpack.c.l.b16 %v479
  %v551 = vunpack.c.l.b16 %v480
  %v552 = vunpack.c.l.b16 %v481
  %v553 = vunpack.c.l.b16 %v482
  %v554 = vunpack.c.l.b16 %v483
  %v555 = vunpack.c.l.b16 %v484
  %v556 = vunpack.c.l.b16 %v485
  %v557 = vunpack.c.l.b16 %v486
  %v558 = vunpack.c.l.b16 %v487
  %v559 = vunpack.c.l.b16 %v488
  %v560 = vunpack.c.l.b16 %v489
  %v561 = vunpack.c.l.b16 %v490
  %v562 = vunpack.c.l.b16 %v491
  %v563 = vunpack.c.l.b16 %v492
  %v564 = vunpack.c.l.b16 %v493
  %v565 = vunpack.c.l.b16 %v494
  %v566 = vunpack.c.l.b16 %v495
  %v567 = vunpack.c.l.b16 %v496
  %v568 = vunpack.c.l.b16 %v497
  %v569 = vunpack.c.l.b16 %v498
  %v570 = vunpack.c.l.b16 %v499
  %v571 = vunpack.c.l.b16 %v500
  %v572 = vunpack.c.l.b16 %v501
  %v573 = vunpack.c.l.b16 %v502
  %v574 = vunpack.c.l.b16 %v503
  %v575 = vunpack.c.l.b16 %v504
  %v576 = vunpack.c.l.b16 %v505
  %v577 = vunpack.c.l.b16 %v506
  %v578 = vunpack.c.l.b16 %v507
  %v579 = vunpack.c.l.b16 %v508
  %v580 = vunpack.c.l.b16 %v509
  %v581 = vpack.c.b16 %v550, %v549
  %v582 = vpack.c.b16 %v552, %v551
  %v583 = vpack.c.b16 %v554, %v553
  %v584 = vpack.c.b16 %v556, %v555
  %v585 = vpack.c.b16 %v558, %v557
  %v586 = vpack.c.b16 %v560, %v559
  %v587 = vpack.c.b16 %v562, %v561
  %v588 = vpack.c.b16 %v564, %v563
  %v589 = vpack.c.b16 %v566, %v565
  %v590 = vpack.c.b16 %v568, %v567
  %v591 = vpack.c.b16 %v570, %v569
  %v592 = vpack.c.b16 %v572, %v571
  %v593 = vpack.c.b16 %v574, %v573
  %v594 = vpack.c.b16 %v576, %v575
  %v595 = vpack.c.b16 %v578, %v577
  %v596 = vpack.c.b16 %v580, %v579
  %613 = vmatprep.subr.bf16.mxu0 0
  %614 = vmatpush1.bf16.msra.mxu0 %v581
  %615 = vmatprep.subr.bf16.mxu0 0
  %616 = vmatpush1.bf16.msra.mxu0 %v582
  %617 = vmatprep.subr.bf16.mxu0 0
  %618 = vmatpush1.bf16.msra.mxu0 %v583
  %619 = vmatprep.subr.bf16.mxu0 0
  %620 = vmatpush1.bf16.msra.mxu0 %v584
  %621 = vmatprep.subr.bf16.mxu0 0
  %622 = vmatpush1.bf16.msra.mxu0 %v585
  %623 = vmatprep.subr.bf16.mxu0 0
  %624 = vmatpush1.bf16.msra.mxu0 %v586
  %625 = vmatprep.subr.bf16.mxu0 0
  %626 = vmatpush1.bf16.msra.mxu0 %v587
  %627 = vmatprep.subr.bf16.mxu0 0
  %628 = vmatpush1.bf16.msra.mxu0 %v588
  %629 = vmatprep.subr.bf16.mxu0 0
  %630 = vmatpush1.bf16.msra.mxu0 %v589
  %631 = vmatprep.subr.bf16.mxu0 0
  %632 = vmatpush1.bf16.msra.mxu0 %v590
  %633 = vmatprep.subr.bf16.mxu0 0
  %634 = vmatpush1.bf16.msra.mxu0 %v591
  %635 = vmatprep.subr.bf16.mxu0 0
  %636 = vmatpush1.bf16.msra.mxu0 %v592
  %637 = vmatprep.subr.bf16.mxu0 0
  %638 = vmatpush1.bf16.msra.mxu0 %v593
  %639 = vmatprep.subr.bf16.mxu0 0
  %640 = vmatpush1.bf16.msra.mxu0 %v594
  %641 = vmatprep.subr.bf16.mxu0 0
  %642 = vmatpush1.bf16.msra.mxu0 %v595
  %643 = vmatprep.subr.bf16.mxu0 0
  %644 = vmatpush1.bf16.msra.mxu0 %v596
  %645 = vmatprep.mubr.bf16.mxu0 %v34
  %646 = vmatmul.mubr.bf16.gmra.mrb[0].mxu0 %v477
  %v647 = vpop.f32.mrb[0].mxu0
  %v648 = vadd.f32 %v515, %v647
  %v649 = vpop.f32.mrb[0].mxu0
  %v650 = vpop.f32.mrb[0].mxu0
  %v651 = vpop.f32.mrb[0].mxu0
  %652 = vdwg.mxu0
  %vm653 = vcmask 261120
  %654 = vst.msk [vmem:[%s9] sm:$0xff] %vm653, %v648
  // Predicated region
  $region38: #{full_connect_mlp.1} parent=0 // pred_check
    _
  $region39: #{full_connect_mlp.1} parent=0 // pred_check_branch
    %656 = sbr.rel (0) target = $region41
  $region40: #{full_connect_mlp.1} parent=0 // pred_region
    _
  $region41: #{full_connect_mlp.1} parent=0 // pred_fallthru
    _
  // Predicated region
  $region42: #{full_connect_mlp.1} parent=0 // pred_check
    _
  $region43: #{full_connect_mlp.1} parent=0 // pred_check_branch
    %658 = sbr.rel (0) target = $region45
  $region44: #{full_connect_mlp.1} parent=0 // pred_region
    _
  $region45: #{full_connect_mlp.1} parent=0 // pred_fallthru
    _

</llo_original>
